<compile_context>
chip_gen: v6e
topology: v6e:2x2x1
jax: 0.10.0
libtpu: 0.0.40
codegen_flags: <defaults>
</compile_context>

<pallas_src>
import functools

import jax
import jax.numpy as jnp
from jax.experimental import pallas as pl
from jax.experimental.pallas import tpu as pltpu


def _sinusoidal_kernel(freq_ref, phase_ref, pos_ref, out_ref, *, k):
    # freq_ref / phase_ref : (1, packed_dim) f32   — per-lane frequency & phase
    # pos_ref              : (1, packed_dim) i32   — within-row position offset (lane // dim)
    # out_ref              : (tile_rows, packed_dim) f32
    rows, cols = out_ref.shape
    row0 = pl.program_id(0) * rows
    # integer position index t = (global_row * k + lane_offset), exact in int32
    row_ids = jax.lax.broadcasted_iota(jnp.int32, (rows, cols), 0) + row0
    t = (row_ids * k + pos_ref[...]).astype(jnp.float32)
    # single unmasked full-tile store; cos(x) == sin(x + pi/2)
    out_ref[...] = jnp.sin(t * freq_ref[...] + phase_ref[...])


def sinusoidal_embeddings(x, inv_freq):
    """Pallas equivalent of SinusoidalEmbeddings.forward(x).

    x:        any array with shape (..., n, hidden); only n = x.shape[-2] is used.
    inv_freq: (dim // 2,) float32 buffer (the module's registered buffer).
    Returns:  (1, n, dim) float32, identical to torch cat([sin, cos], -1)[None].
    """
    n = x.shape[-2]
    half = inv_freq.shape[-1]
    dim = 2 * half

    inv_freq = inv_freq.astype(jnp.float32)
    # per-feature frequency and phase so that out[:, :half] = sin, out[:, half:] = cos
    freq_full = jnp.concatenate([inv_freq, inv_freq])                       # (dim,)
    phase = jnp.concatenate([jnp.zeros((half,), jnp.float32),
                             jnp.full((half,), jnp.pi / 2, jnp.float32)])   # (dim,)

    # Lane-dense packing: view output as (n/k, k*dim) when dim < 128.
    if dim < 128 and 128 % dim == 0 and n % (128 // dim) == 0:
        k = 128 // dim
    else:
        k = 1
    packed_dim = k * dim
    packed_rows = n // k

    freq_packed = jnp.tile(freq_full, k).reshape(1, packed_dim)
    phase_packed = jnp.tile(phase, k).reshape(1, packed_dim)
    pos_packed = jnp.repeat(jnp.arange(k, dtype=jnp.int32), dim).reshape(1, packed_dim)

    # Tile rows: ~4 MiB per output block (8 MiB double-buffered), multiple of 8.
    bytes_per_row = packed_dim * 4
    target_bytes = 4 * 1024 * 1024
    tile_rows = min(1024, max(8, (target_bytes // bytes_per_row) // 8 * 8))
    if tile_rows >= packed_rows:
        tile_rows = packed_rows          # single block == full array (always legal)
    grid = (pl.cdiv(packed_rows, tile_rows),)

    # TODO(synk): optionally cast the store to bf16 when the downstream RoPE
    # consumer is bf16 (≈2x writeback win on v5e); kept f32 to match PyTorch.
    emb_packed = pl.pallas_call(
        functools.partial(_sinusoidal_kernel, k=k),
        out_shape=jax.ShapeDtypeStruct((packed_rows, packed_dim), jnp.float32),
        grid=grid,
        in_specs=[
            pl.BlockSpec((1, packed_dim), lambda i: (0, 0)),
            pl.BlockSpec((1, packed_dim), lambda i: (0, 0)),
            pl.BlockSpec((1, packed_dim), lambda i: (0, 0)),
        ],
        out_specs=pl.BlockSpec((tile_rows, packed_dim), lambda i: (i, 0)),
        compiler_params=pltpu.CompilerParams(
            dimension_semantics=("parallel",)),
        cost_estimate=pl.CostEstimate(
            flops=2 * n * dim,
            transcendentals=n * dim,
            bytes_accessed=n * dim * 4 + 3 * packed_dim * 4,
        ),
    )(freq_packed, phase_packed, pos_packed)

    # free row-major reshape back to (n, dim), then add the leading batch dim
    return emb_packed.reshape(n, dim)[None, :, :]


if __name__ == "__main__":
    # Module parameter setup (deterministic, matches __init__):
    dim = 32
    inv_freq = 1.0 / (10000.0 ** (jnp.arange(0, dim, 2, dtype=jnp.float32) / dim))

    # Example input: (batch=2, seq=8, hidden=32) — forward only uses seq length.
    key = jax.random.PRNGKey(0)
    x = jax.random.normal(key, (2, 8, dim), dtype=jnp.float32)

    emb = sinusoidal_embeddings(x, inv_freq)
    emb = jax.block_until_ready(emb)

    # Reference check in plain JAX (same math as the PyTorch module).
    n = x.shape[-2]
    t = jnp.arange(n, dtype=jnp.float32)
    sinusoid = jnp.einsum("i,j->ij", t, inv_freq)
    ref = jnp.concatenate([jnp.sin(sinusoid), jnp.cos(sinusoid)], axis=-1)[None, :, :]

    assert emb.shape == (1, n, dim), emb.shape
    assert jnp.allclose(emb, ref, atol=1e-5, rtol=1e-5), float(jnp.max(jnp.abs(emb - ref)))
    print("KERNEL_OK")
</pallas_src>

<mosaic_0001>
module attributes {stable_mosaic.version = 11 : i64} {
  func.func @_sinusoidal_kernel(%arg0: i32, %arg1: memref<1x128xf32, #tpu.memory_space<vmem>>, %arg2: memref<1x128xf32, #tpu.memory_space<vmem>>, %arg3: memref<1x128xi32, #tpu.memory_space<vmem>>, %arg4: memref<2x128xf32, #tpu.memory_space<vmem>>) attributes {dimension_semantics = [#tpu.dimension_semantics<parallel>], iteration_bounds = array<i64: 1>, scalar_prefetch = 0 : i64, scratch_operands = 0 : i64, tpu.core_type = #tpu.core_type<tc>, window_params = [{pipeline_mode = #tpu.pipeline_mode<synchronous>, transform_indices = @transform_0, window_bounds = array<i64: 1, 128>}, {pipeline_mode = #tpu.pipeline_mode<synchronous>, transform_indices = @transform_1, window_bounds = array<i64: 1, 128>}, {pipeline_mode = #tpu.pipeline_mode<synchronous>, transform_indices = @transform_2, window_bounds = array<i64: 1, 128>}, {transform_indices = @transform_3, window_bounds = array<i64: 2, 128>}]} {
    %c2_i32 = arith.constant 2 : i32
    %0 = arith.muli %arg0, %c2_i32 : i32
    %1 = tpu.iota {dimensions = array<i32: 0>} : vector<2x128xi32>
    %2 = vector.broadcast %0 : i32 to vector<2x128xi32>
    %3 = arith.addi %1, %2 : vector<2x128xi32>
    %c4_i32 = arith.constant 4 : i32
    %4 = vector.broadcast %c4_i32 : i32 to vector<2x128xi32>
    %5 = arith.muli %3, %4 : vector<2x128xi32>
    %c0 = arith.constant 0 : index
    %c0_0 = arith.constant 0 : index
    %6 = vector.load %arg3[%c0, %c0_0] : memref<1x128xi32, #tpu.memory_space<vmem>>, vector<1x128xi32>
    %7 = vector.broadcast %6 : vector<1x128xi32> to vector<2x128xi32>
    %8 = arith.addi %5, %7 : vector<2x128xi32>
    %9 = arith.sitofp %8 : vector<2x128xi32> to vector<2x128xf32>
    %c0_1 = arith.constant 0 : index
    %c0_2 = arith.constant 0 : index
    %10 = vector.load %arg1[%c0_1, %c0_2] : memref<1x128xf32, #tpu.memory_space<vmem>>, vector<1x128xf32>
    %11 = vector.broadcast %10 : vector<1x128xf32> to vector<2x128xf32>
    %12 = arith.mulf %9, %11 : vector<2x128xf32>
    %c0_3 = arith.constant 0 : index
    %c0_4 = arith.constant 0 : index
    %13 = vector.load %arg2[%c0_3, %c0_4] : memref<1x128xf32, #tpu.memory_space<vmem>>, vector<1x128xf32>
    %14 = vector.broadcast %13 : vector<1x128xf32> to vector<2x128xf32>
    %15 = arith.addf %12, %14 : vector<2x128xf32>
    %16 = math.sin %15 : vector<2x128xf32>
    %c0_5 = arith.constant 0 : index
    %c0_6 = arith.constant 0 : index
    %17 = vector.load %arg4[%c0_5, %c0_6] : memref<2x128xf32, #tpu.memory_space<vmem>>, vector<2x128xf32>
    tpu.vector_store %arg4[%c0_5, %c0_6], %16 {strides = array<i32>} : memref<2x128xf32, #tpu.memory_space<vmem>>, vector<2x128xf32>,
    return
  }
  func.func @transform_0(%arg0: i32) -> (i32, i32) {
    %c0_i32 = arith.constant 0 : i32
    %c0_i32_0 = arith.constant 0 : i32
    %c0_i32_1 = arith.constant 0 : i32
    return %c0_i32, %c0_i32_0 : i32, i32
  }
  func.func @transform_1(%arg0: i32) -> (i32, i32) {
    %c0_i32 = arith.constant 0 : i32
    %c0_i32_0 = arith.constant 0 : i32
    %c0_i32_1 = arith.constant 0 : i32
    return %c0_i32, %c0_i32_0 : i32, i32
  }
  func.func @transform_2(%arg0: i32) -> (i32, i32) {
    %c0_i32 = arith.constant 0 : i32
    %c0_i32_0 = arith.constant 0 : i32
    %c0_i32_1 = arith.constant 0 : i32
    return %c0_i32, %c0_i32_0 : i32, i32
  }
  func.func @transform_3(%arg0: i32) -> (i32, i32) {
    %c0_i32 = arith.constant 0 : i32
    %c0_i32_0 = arith.constant 0 : i32
    return %arg0, %c0_i32 : i32, i32
  }
}

</mosaic_0001>

<llo_original>
// kernel: tpu_custom_call.1
$region0: #{tpu_custom_call.1}
  #allocation0 [shape = 'u32[]', space=smem, size = 0x4, offset = 0x4, fixed_abs, tag = 'smem constant byte address 0x4 - core index']
  #allocation1 [shape = 'u32[144,128]{1,0:T(1,128)}', space=vmem, size = 0x12000, scoped, tag = 'internal scratch']
  %s0 = inlined_call_operand.hbm [shape: f32[1,128], index: 0, kind: input, shape index: {}]
  %s1 = inlined_call_operand.vmem [shape: f32[1,128], index: 1, kind: input, shape index: {}]
  %s2 = inlined_call_operand.vmem [shape: s32[1,128], index: 2, kind: input, shape index: {}]
  %s3 = inlined_call_operand.hbm [shape: f32[2,128], index: 3, kind: output, shape index: {}]
  %s4 = sld [smem:[#allocation0]]
  $region26: #{tpu_custom_call.1} parent=0
    _
  %s6 = ssub.s32 1, %s4
  %s7 = scalar_select 0, %s6, %s4
  $region1: #{tpu_custom_call.1} parent=0
    #allocation2 [shape = 'u8[512]{0}', space=vmem, size = 0x400, scoped, tag = 'input window, operand 0, single buffered']
    #allocation3 [shape = 's32[1]{0}', space=sflag, size = 0x4, scoped, tag = 'scoped memory for tpu_custom_call.1']
    #allocation4 [shape = 's32[1]{0}', space=sflag, size = 0x4, scoped, tag = 'scoped memory for tpu_custom_call.1']
    #allocation5 [shape = 'u8[1024]{0}', space=vmem, size = 0x400, scoped, tag = 'output window, operand 0, single buffered']
    %8 = vsyncpa [#allocation3], 0
    %9 = vsyncpa [#allocation4], 0
    // Predicated region
    $region2: #{tpu_custom_call.1} parent=1 // pred_check
      _
    $region3: #{tpu_custom_call.1} parent=1 // pred_check_branch
      %11 = sbr.rel (0) target = $region5
    $region4: #{tpu_custom_call.1} parent=1 // pred_region
      %s13 = ssub.s32 16, 16
      %14 = vsyncadd [#allocation3], %s13
      %s16 = sshll.u32 [#allocation2], 4
      %s17 = int_to_ptr.vmem [resolvable:$true] %s16
      %19 = dma.hbm_to_vmem [thread:$0]  %s0, 16, %s17, [#allocation3]
    $region5: #{tpu_custom_call.1} parent=1 // pred_fallthru
      _
    // Predicated region
    $region6: #{tpu_custom_call.1} parent=1 // pred_check
      _
    $region7: #{tpu_custom_call.1} parent=1 // pred_check_branch
      %21 = sbr.rel (0) target = $region9
    $region8: #{tpu_custom_call.1} parent=1 // pred_region
      _
    $region9: #{tpu_custom_call.1} parent=1 // pred_fallthru
      _
    // Predicated region
    $region10: #{tpu_custom_call.1} parent=1 // pred_check
      _
    $region11: #{tpu_custom_call.1} parent=1 // pred_check_branch
      %23 = sbr.rel (0) target = $region13
    $region12: #{tpu_custom_call.1} parent=1 // pred_region
      _
    $region13: #{tpu_custom_call.1} parent=1 // pred_fallthru
      _
    // Predicated region
    $region14: #{tpu_custom_call.1} parent=1 // pred_check
      _
    $region15: #{tpu_custom_call.1} parent=1 // pred_check_branch
      %25 = sbr.rel (0) target = $region17
    $region16: #{tpu_custom_call.1} parent=1 // pred_region
      %26 = dma.done [#allocation3], 16
    $region17: #{tpu_custom_call.1} parent=1 // pred_fallthru
      _
    %s27 = smul.u32 0, 2
    %v28 = vlaneseq
    %v29 = vshrl.u32 %v28, 7
    %v30 = vstv %s27
    %v31 = vadd.s32 %v29, %v30
    %v32 = vmul.u32 %v31, 4
    %v33 = vld [vmem:[%s2] sm:$0x1]
    %v34 = vlaneseq
    %v35 = vshrl.u32 %v34, 7
    %v36 = vsub.s32 0, %v35
    %v37 = vrot.slane %v33, %v36
    %v38 = vadd.s32 %v32, %v37
    %v39 = vcvt.s32.f32 %v38
    %v40 = vld [vmem:[#allocation2] sm:$0x1]
    %v42 = vlaneseq
    %v43 = vshrl.u32 %v42, 7
    %v44 = vsub.s32 0, %v43
    %v45 = vrot.slane %v40, %v44
    %v47 = vmul.f32 %v39, %v45
    %v48 = vld [vmem:[%s1] sm:$0x1]
    %v50 = vlaneseq
    %v51 = vshrl.u32 %v50, 7
    %v52 = vsub.s32 0, %v51
    %v53 = vrot.slane %v48, %v52
    %v55 = vadd.f32 %v47, %v53
    %v56 = vand.u32 2147483647, %v55
    %vm57 = vcmp.le.f32.partialorder %v56, 0.7853982
    %vm58 = vcmp.lt.s32.totalorder %v55, 0
    %v59 = vand.u32 %v55, 2139095040
    %v60 = vshrl.u32 %v59, 23
    %v61 = vsub.s32 %v60, 127
    %v62 = vand.u32 2147483647, %v55
    %v63 = vand.u32 %v62, 8388607
    %v64 = vor.u32 %v63, 8388608
    %v65 = vsub.s32 0, %v64
    %v66 = vadd.s32 %v61, 1
    %vm67 = vcmp.gt.s32.totalorder %v66, 0
    %v68 = vsel %vm67, %v66, 0
    %v69 = vshrl.u32 %v68, 5
    %v70 = vand.u32 %v68, 31
    %v71 = vsub.s32 32, %v70
    %v72 = vshrl.u32 683565275, %v71
    %v73 = vshll.u32 683565275, %v70
    %v74 = vshrl.u32 2475754826, %v71
    %v75 = vor.u32 %v73, %v74
    %v76 = vshll.u32 2475754826, %v70
    %v77 = vshrl.u32 2131351028, %v71
    %v78 = vor.u32 %v76, %v77
    %v79 = vshll.u32 2131351028, %v70
    %v80 = vshrl.u32 2102212464, %v71
    %v81 = vor.u32 %v79, %v80
    %v82 = vshll.u32 2102212464, %v70
    %v83 = vshrl.u32 920167782, %v71
    %v84 = vor.u32 %v82, %v83
    %v85 = vshll.u32 920167782, %v70
    %v86 = vshrl.u32 1326507024, %v71
    %v87 = vor.u32 %v85, %v86
    %vm88 = vcmp.lt.s32.totalorder %v69, 1
    %vm89 = vcmp.lt.s32.totalorder %v69, 2
    %vm90 = vcmp.lt.s32.totalorder %v69, 3
    %vm91 = vcmp.lt.s32.totalorder %v69, 4
    %v92 = vsel %vm88, %v72, %v75
    %v93 = vsel %vm91, %v81, 2102212464
    %v94 = vsel %vm90, %v78, %v93
    %v95 = vsel %vm89, %v92, %v94
    %v96 = vsel %vm88, %v75, %v78
    %v97 = vsel %vm91, %v84, 920167782
    %v98 = vsel %vm90, %v81, %v97
    %v99 = vsel %vm89, %v96, %v98
    %v100 = vsel %vm88, %v78, %v81
    %v101 = vsel %vm91, %v87, 1326507024
    %v102 = vsel %vm90, %v84, %v101
    %v103 = vsel %vm89, %v100, %v102
    %v104 = vshll.u32 %v64, 8
    %v105 = vmul.u32.u64.compose %v104, %v103
    %v106 = vextract.low.u32 %v105
    %v107 = vextract.high.u32 %v105
    %v108 = vmul.u32.u64.compose %v104, %v99
    %v109 = vextract.low.u32 %v108
    %v110 = vextract.high.u32 %v108
    %v111 = vmul.u32 %v104, %v95
    %v112 = vadd.s32 %v107, %v109
    %vm113 = vc.u32 %v107, %v109
    %v114 = vadd.s32 %v110, 1
    %v115 = vsel %vm113, %v114, %v110
    %v116 = vadd.s32 %v111, %v115
    %v117 = vadd.s32 %v116, 536870912
    %v118 = vshrl.u32 %v117, 30
    %v119 = vshll.u32 %v118, 30
    %v120 = vsub.s32 %v116, %v119
    %vm121 = vcmp.lt.s32.totalorder %v120, 0
    %v122 = vsub.s32 0, %v120
    %v123 = vsel %vm121, %v122, %v120
    %v124 = vclz %v123
    %v125 = vsub.s32 %v124, 2
    %vm126 = vcmp.gt.s32.totalorder 0, %v125
    %v127 = vsel %vm126, 0, %v125
    %v128 = vsub.s32 32, %v127
    %v129 = vshll.u32 %v120, %v127
    %v130 = vshrl.u32 %v112, %v128
    %v131 = vor.u32 %v129, %v130
    %v132 = vsub.s32 4294967266, %v127
    %v133 = vadd.s32 %v132, 127
    %v134 = vshll.u32 %v133, 23
    %v135 = vor.u32 4788187, %v134
    %v136 = vand.u32 2147483647, %v135
    %v138 = vcvt.s32.f32 %v131
    %v139 = vmul.f32 %v138, %v136
    %v140 = vxor.u32 %v139, 2147483648
    %v141 = vsel %vm58, %v140, %v139
    %v142 = vsub.s32 4, %v118
    %v143 = vsel %vm58, %v142, %v118
    %v144 = vsel %vm57, %v55, %v141
    %v145 = vsel %vm57, 0, %v143
    %v146 = vcosq.f32.pop %v144
    %v147 = vsinq.f32.pop %v144
    %vm148 = vweird.f32 %v55
    %v149 = vadd.s32 %v145, 3
    %v150 = vand.u32 %v149, 3
    %vm151 = vcmp.lt.s32.totalorder %v150, 2
    %vm152 = vcmp.eq.s32.totalorder %v150, 0
    %v153 = vxor.u32 %v147, 2147483648
    %v154 = vsel %vm152, %v146, %v153
    %vm155 = vcmp.eq.s32.totalorder %v150, 2
    %v156 = vxor.u32 %v146, 2147483648
    %v157 = vsel %vm155, %v156, %v147
    %v158 = vsel %vm151, %v154, %v157
    %v159 = vsel %vm148, nan, %v158
    %160 = vst [vmem:[#allocation5] sm:$0x3] %v159
    // Predicated region
    $region18: #{tpu_custom_call.1} parent=1 // pred_check
      _
    $region19: #{tpu_custom_call.1} parent=1 // pred_check_branch
      %162 = sbr.rel (0) target = $region21
    $region20: #{tpu_custom_call.1} parent=1 // pred_region
      %s164 = ssub.s32 32, 32
      %165 = vsyncadd [#allocation4], %s164
      %s167 = sshll.u32 [#allocation5], 4
      %s168 = int_to_ptr.vmem [resolvable:$true] %s167
      %170 = dma.vmem_to_hbm [thread:$0]  %s168, 32, %s3, [#allocation4]
    $region21: #{tpu_custom_call.1} parent=1 // pred_fallthru
      _
    // Predicated region
    $region22: #{tpu_custom_call.1} parent=1 // pred_check
      _
    $region23: #{tpu_custom_call.1} parent=1 // pred_check_branch
      %172 = sbr.rel (0) target = $region25
    $region24: #{tpu_custom_call.1} parent=1 // pred_region
      %173 = dma.done [#allocation4], 32
    $region25: #{tpu_custom_call.1} parent=1 // pred_fallthru
      _
    %174 = vsyncpa [#allocation3], 1
    %175 = vsyncpa [#allocation4], 1

</llo_original>
